<compile_context>
chip_gen: v6e
topology: v6e:2x2x1
jax: 0.10.0
libtpu: 0.0.40
codegen_flags: <defaults>
</compile_context>

<pallas_src>
import jax
import jax.numpy as jnp
from jax import lax
from jax.experimental import pallas as pl
from jax.experimental.pallas import tpu as pltpu


def _round_up(x: int, m: int) -> int:
    return (x + m - 1) // m * m


def _make_kernel(l_out: int, C: int, K: int, chunk: int, n_chunks: int):
    KC = K * C

    def kernel(x_ref, w_ref, b_ref, o_ref):
        """x_ref: (TB, (L+2p)*C) compute dtype, l-major flat
           w_ref: (K*C, O_pad) compute dtype (k-major, c-minor rows)
           b_ref: (1, O_pad) f32
           o_ref: (TB, O_pad)"""
        w = w_ref[...]
        b = b_ref[...]

        def chunk_body(ci, carry):
            r0 = ci * chunk
            if not isinstance(r0, int):
                r0 = pl.multiple_of(r0, chunk)
            xc = x_ref[pl.ds(r0, chunk), :]               # (chunk, L_pad*C)
            best = None
            for t in range(l_out):                        # static, unrolled
                # Window t is a contiguous K*C lane slice in the l-major flat
                # layout: im2col row built in vregs, never in HBM.
                rows = xc[:, t * C:t * C + KC]            # (chunk, K*C)
                y = lax.dot_general(
                    rows, w,
                    dimension_numbers=(((1,), (0,)), ((), ())),
                    preferred_element_type=jnp.float32)   # (chunk, O_pad) f32
                best = y if best is None else jnp.maximum(best, y)
            # bias + ReLU hoisted past the time-max (monotone -> exact)
            out = jnp.maximum(best + b, 0.0)
            o_ref[pl.ds(r0, chunk), :] = out.astype(o_ref.dtype)
            return carry

        if n_chunks == 1:
            chunk_body(0, 0)
        else:
            lax.fori_loop(0, n_chunks, chunk_body, 0, unroll=True)

    return kernel


def cnn_forward(x, weight, bias, *, padding=1, block_b=1024,
                compute_dtype=jnp.bfloat16):
    """x: (B, C, L) NCW (PyTorch layout); weight: (O, C, K); bias: (O,)."""
    B, C, L = x.shape
    O, Cw, K = weight.shape
    assert Cw == C
    l_out = L + 2 * padding - K + 1
    assert l_out >= 1

    LANE = 128
    CHUNK = 128                       # rows per in-kernel sub-chunk (bounds f32 live set)
    L_pad = L + 2 * padding
    LC = L_pad * C                    # compact flat last dim (NOT padded to 128 in HBM)
    KC = K * C
    O_pad = _round_up(O, LANE)        # lane-dense output -> unmasked stores

    # Words per grid step: >= 2 grid steps for non-tiny B (v7x megacore),
    # sublane-aligned, multiple of CHUNK when larger than one chunk.
    half_b = _round_up(max(1, -(-B // 2)), 8)
    TB = max(8, min(block_b, half_b))
    if TB > CHUNK:
        TB = _round_up(TB, CHUNK)
    chunk = min(CHUNK, TB)
    n_chunks = TB // chunk
    B_pad = _round_up(B, TB)
    grid = (B_pad // TB,)

    # ---- compact pre-pass: cast FIRST (halves pre-pass HBM), pad L, batch,
    # then l-major flatten so each conv window is a contiguous K*C lane slice.
    x_c = x.astype(compute_dtype)
    x_c = jnp.pad(x_c, ((0, B_pad - B), (0, 0), (padding, padding)))   # (B_pad, C, L_pad)
    x_flat = jnp.transpose(x_c, (0, 2, 1)).reshape(B_pad, LC)          # (B_pad, L_pad*C)

    # Weights -> (K*C, O_pad), (k, c) ordering matching the window slices.
    w_p = jnp.transpose(weight, (2, 1, 0)).reshape(KC, O)
    w_p = jnp.pad(w_p, ((0, 0), (0, O_pad - O))).astype(compute_dtype)
    b_p = jnp.pad(bias, (0, O_pad - O)).astype(jnp.float32).reshape(1, O_pad)

    kernel = _make_kernel(l_out, C, K, chunk, n_chunks)

    out_p = pl.pallas_call(
        kernel,
        out_shape=jax.ShapeDtypeStruct((B_pad, O_pad), x.dtype),
        grid=grid,
        in_specs=[
            pl.BlockSpec((TB, LC), lambda i: (i, 0)),        # last dim full-extent (<128 OK)
            pl.BlockSpec((KC, O_pad), lambda i: (0, 0)),
            pl.BlockSpec((1, O_pad), lambda i: (0, 0)),
        ],
        out_specs=pl.BlockSpec((TB, O_pad), lambda i: (i, 0)),
        compiler_params=pltpu.CompilerParams(
            # batch/word axis is independent -> shard across v7x's two TCs
            # (harmless no-op on single-TC v5e/v6e).
            dimension_semantics=("parallel",),
            # double-buffered tiles + scratch stay in the low-MB range,
            # safe under v7x's 32 MiB scoped / 64 MiB physical VMEM.
            vmem_limit_bytes=32 * 1024 * 1024,
        ),
    )(x_flat, w_p, b_p)

    # Slice off batch / output-channel padding outside the kernel.
    return out_p[:B, :O]


def ref_forward(x, weight, bias, *, padding=1):
    """Pure-JAX reference (independent of the kernel code path)."""
    B, C, L = x.shape
    O, _, K = weight.shape
    xp = jnp.pad(x, ((0, 0), (0, 0), (padding, padding)))
    l_out = L + 2 * padding - K + 1
    ys = []
    for t in range(l_out):
        win = xp[:, :, t:t + K]                                      # (B, C, K)
        ys.append(jnp.einsum('bck,ock->bo', win, weight,
                             precision=jax.lax.Precision.HIGHEST) + bias)
    y = jnp.stack(ys, axis=-1)                                       # (B, O, L_out)
    return jnp.max(jax.nn.relu(y), axis=-1)                          # (B, O)


if __name__ == "__main__":
    # Module hyperparams (small, consistent with the forward):
    char_embed_size = 4      # in_channels
    word_embed_size = 32     # out_channels
    max_word_length = 16
    kernel_size = 5
    padding = 1

    key = jax.random.PRNGKey(0)
    kx, kw, kb, kx2 = jax.random.split(key, 4)

    # Deterministic Conv1d-style init: U(-bound, bound), bound = 1/sqrt(C*K)
    fan_in = char_embed_size * kernel_size
    bound = 1.0 / float(fan_in) ** 0.5
    weight = jax.random.uniform(
        kw, (word_embed_size, char_embed_size, kernel_size),
        minval=-bound, maxval=bound, dtype=jnp.float32)
    bias = jax.random.uniform(
        kb, (word_embed_size,), minval=-bound, maxval=bound, dtype=jnp.float32)

    # --- small case (module-sized): batch=2 words
    x = jax.random.normal(
        kx, (2, char_embed_size, max_word_length), dtype=jnp.float32)
    ref = jax.block_until_ready(ref_forward(x, weight, bias, padding=padding))

    out_f32 = jax.block_until_ready(
        cnn_forward(x, weight, bias, padding=padding, compute_dtype=jnp.float32))
    assert out_f32.shape == (2, word_embed_size)
    assert jnp.allclose(out_f32, ref, atol=1e-5, rtol=1e-5), "small f32 mismatch vs reference"

    out_bf16 = jax.block_until_ready(
        cnn_forward(x, weight, bias, padding=padding))
    assert out_bf16.shape == (2, word_embed_size)
    assert jnp.allclose(out_bf16, ref, atol=2e-2, rtol=2e-2), "small bf16 mismatch vs reference"

    # --- larger batch: exercises grid > 1 (both v7x TCs) and the in-kernel
    # row-chunk loop; f32 compute path for a tight check.
    xb = jax.random.normal(
        kx2, (512, char_embed_size, max_word_length), dtype=jnp.float32)
    refb = jax.block_until_ready(ref_forward(xb, weight, bias, padding=padding))
    outb = jax.block_until_ready(
        cnn_forward(xb, weight, bias, padding=padding, compute_dtype=jnp.float32))
    assert outb.shape == (512, word_embed_size)
    assert jnp.allclose(outb, refb, atol=1e-4, rtol=1e-4), "large f32 mismatch vs reference"

    print("KERNEL_OK")
</pallas_src>

<mosaic_0001>
module attributes {stable_mosaic.version = 11 : i64} {
  func.func @kernel(%arg0: i32, %arg1: memref<8x72xf32, #tpu.memory_space<vmem>>, %arg2: memref<20x128xf32, #tpu.memory_space<vmem>>, %arg3: memref<1x128xf32, #tpu.memory_space<vmem>>, %arg4: memref<8x128xf32, #tpu.memory_space<vmem>>) attributes {dimension_semantics = [#tpu.dimension_semantics<parallel>], iteration_bounds = array<i64: 1>, scalar_prefetch = 0 : i64, scratch_operands = 0 : i64, tpu.core_type = #tpu.core_type<tc>, window_params = [{transform_indices = @transform_0, window_bounds = array<i64: 8, 72>}, {pipeline_mode = #tpu.pipeline_mode<synchronous>, transform_indices = @transform_1, window_bounds = array<i64: 20, 128>}, {pipeline_mode = #tpu.pipeline_mode<synchronous>, transform_indices = @transform_2, window_bounds = array<i64: 1, 128>}, {transform_indices = @transform_3, window_bounds = array<i64: 8, 128>}]} {
    %c0 = arith.constant 0 : index
    %c0_0 = arith.constant 0 : index
    %0 = vector.load %arg2[%c0, %c0_0] : memref<20x128xf32, #tpu.memory_space<vmem>>, vector<20x128xf32>
    %c0_1 = arith.constant 0 : index
    %c0_2 = arith.constant 0 : index
    %1 = vector.load %arg3[%c0_1, %c0_2] : memref<1x128xf32, #tpu.memory_space<vmem>>, vector<1x128xf32>
    %c0_3 = arith.constant 0 : index
    %c0_4 = arith.constant 0 : index
    %2 = vector.load %arg1[%c0_3, %c0_4] : memref<8x72xf32, #tpu.memory_space<vmem>>, vector<8x72xf32>
    %3 = vector.extract_strided_slice %2 {offsets = [0, 0], sizes = [8, 20], strides = [1, 1]} : vector<8x72xf32> to vector<8x20xf32>
    %cst = arith.constant dense<0.000000e+00> : vector<8x128xf32>
    %4 = tpu.matmul %3, %0, %cst {dimension_numbers = #tpu.dot_dimension_numbers<[1], [0], [0], [1], [0, 0, 1, 1], [], []>} : vector<8x20xf32>, vector<20x128xf32>, vector<8x128xf32> -> vector<8x128xf32>
    %5 = vector.extract_strided_slice %2 {offsets = [0, 4], sizes = [8, 20], strides = [1, 1]} : vector<8x72xf32> to vector<8x20xf32>
    %cst_5 = arith.constant dense<0.000000e+00> : vector<8x128xf32>
    %6 = tpu.matmul %5, %0, %cst_5 {dimension_numbers = #tpu.dot_dimension_numbers<[1], [0], [0], [1], [0, 0, 1, 1], [], []>} : vector<8x20xf32>, vector<20x128xf32>, vector<8x128xf32> -> vector<8x128xf32>
    %7 = arith.maximumf %4, %6 : vector<8x128xf32>
    %8 = vector.extract_strided_slice %2 {offsets = [0, 8], sizes = [8, 20], strides = [1, 1]} : vector<8x72xf32> to vector<8x20xf32>
    %cst_6 = arith.constant dense<0.000000e+00> : vector<8x128xf32>
    %9 = tpu.matmul %8, %0, %cst_6 {dimension_numbers = #tpu.dot_dimension_numbers<[1], [0], [0], [1], [0, 0, 1, 1], [], []>} : vector<8x20xf32>, vector<20x128xf32>, vector<8x128xf32> -> vector<8x128xf32>
    %10 = arith.maximumf %7, %9 : vector<8x128xf32>
    %11 = vector.extract_strided_slice %2 {offsets = [0, 12], sizes = [8, 20], strides = [1, 1]} : vector<8x72xf32> to vector<8x20xf32>
    %cst_7 = arith.constant dense<0.000000e+00> : vector<8x128xf32>
    %12 = tpu.matmul %11, %0, %cst_7 {dimension_numbers = #tpu.dot_dimension_numbers<[1], [0], [0], [1], [0, 0, 1, 1], [], []>} : vector<8x20xf32>, vector<20x128xf32>, vector<8x128xf32> -> vector<8x128xf32>
    %13 = arith.maximumf %10, %12 : vector<8x128xf32>
    %14 = vector.extract_strided_slice %2 {offsets = [0, 16], sizes = [8, 20], strides = [1, 1]} : vector<8x72xf32> to vector<8x20xf32>
    %cst_8 = arith.constant dense<0.000000e+00> : vector<8x128xf32>
    %15 = tpu.matmul %14, %0, %cst_8 {dimension_numbers = #tpu.dot_dimension_numbers<[1], [0], [0], [1], [0, 0, 1, 1], [], []>} : vector<8x20xf32>, vector<20x128xf32>, vector<8x128xf32> -> vector<8x128xf32>
    %16 = arith.maximumf %13, %15 : vector<8x128xf32>
    %17 = vector.extract_strided_slice %2 {offsets = [0, 20], sizes = [8, 20], strides = [1, 1]} : vector<8x72xf32> to vector<8x20xf32>
    %cst_9 = arith.constant dense<0.000000e+00> : vector<8x128xf32>
    %18 = tpu.matmul %17, %0, %cst_9 {dimension_numbers = #tpu.dot_dimension_numbers<[1], [0], [0], [1], [0, 0, 1, 1], [], []>} : vector<8x20xf32>, vector<20x128xf32>, vector<8x128xf32> -> vector<8x128xf32>
    %19 = arith.maximumf %16, %18 : vector<8x128xf32>
    %20 = vector.extract_strided_slice %2 {offsets = [0, 24], sizes = [8, 20], strides = [1, 1]} : vector<8x72xf32> to vector<8x20xf32>
    %cst_10 = arith.constant dense<0.000000e+00> : vector<8x128xf32>
    %21 = tpu.matmul %20, %0, %cst_10 {dimension_numbers = #tpu.dot_dimension_numbers<[1], [0], [0], [1], [0, 0, 1, 1], [], []>} : vector<8x20xf32>, vector<20x128xf32>, vector<8x128xf32> -> vector<8x128xf32>
    %22 = arith.maximumf %19, %21 : vector<8x128xf32>
    %23 = vector.extract_strided_slice %2 {offsets = [0, 28], sizes = [8, 20], strides = [1, 1]} : vector<8x72xf32> to vector<8x20xf32>
    %cst_11 = arith.constant dense<0.000000e+00> : vector<8x128xf32>
    %24 = tpu.matmul %23, %0, %cst_11 {dimension_numbers = #tpu.dot_dimension_numbers<[1], [0], [0], [1], [0, 0, 1, 1], [], []>} : vector<8x20xf32>, vector<20x128xf32>, vector<8x128xf32> -> vector<8x128xf32>
    %25 = arith.maximumf %22, %24 : vector<8x128xf32>
    %26 = vector.extract_strided_slice %2 {offsets = [0, 32], sizes = [8, 20], strides = [1, 1]} : vector<8x72xf32> to vector<8x20xf32>
    %cst_12 = arith.constant dense<0.000000e+00> : vector<8x128xf32>
    %27 = tpu.matmul %26, %0, %cst_12 {dimension_numbers = #tpu.dot_dimension_numbers<[1], [0], [0], [1], [0, 0, 1, 1], [], []>} : vector<8x20xf32>, vector<20x128xf32>, vector<8x128xf32> -> vector<8x128xf32>
    %28 = arith.maximumf %25, %27 : vector<8x128xf32>
    %29 = vector.extract_strided_slice %2 {offsets = [0, 36], sizes = [8, 20], strides = [1, 1]} : vector<8x72xf32> to vector<8x20xf32>
    %cst_13 = arith.constant dense<0.000000e+00> : vector<8x128xf32>
    %30 = tpu.matmul %29, %0, %cst_13 {dimension_numbers = #tpu.dot_dimension_numbers<[1], [0], [0], [1], [0, 0, 1, 1], [], []>} : vector<8x20xf32>, vector<20x128xf32>, vector<8x128xf32> -> vector<8x128xf32>
    %31 = arith.maximumf %28, %30 : vector<8x128xf32>
    %32 = vector.extract_strided_slice %2 {offsets = [0, 40], sizes = [8, 20], strides = [1, 1]} : vector<8x72xf32> to vector<8x20xf32>
    %cst_14 = arith.constant dense<0.000000e+00> : vector<8x128xf32>
    %33 = tpu.matmul %32, %0, %cst_14 {dimension_numbers = #tpu.dot_dimension_numbers<[1], [0], [0], [1], [0, 0, 1, 1], [], []>} : vector<8x20xf32>, vector<20x128xf32>, vector<8x128xf32> -> vector<8x128xf32>
    %34 = arith.maximumf %31, %33 : vector<8x128xf32>
    %35 = vector.extract_strided_slice %2 {offsets = [0, 44], sizes = [8, 20], strides = [1, 1]} : vector<8x72xf32> to vector<8x20xf32>
    %cst_15 = arith.constant dense<0.000000e+00> : vector<8x128xf32>
    %36 = tpu.matmul %35, %0, %cst_15 {dimension_numbers = #tpu.dot_dimension_numbers<[1], [0], [0], [1], [0, 0, 1, 1], [], []>} : vector<8x20xf32>, vector<20x128xf32>, vector<8x128xf32> -> vector<8x128xf32>
    %37 = arith.maximumf %34, %36 : vector<8x128xf32>
    %38 = vector.extract_strided_slice %2 {offsets = [0, 48], sizes = [8, 20], strides = [1, 1]} : vector<8x72xf32> to vector<8x20xf32>
    %cst_16 = arith.constant dense<0.000000e+00> : vector<8x128xf32>
    %39 = tpu.matmul %38, %0, %cst_16 {dimension_numbers = #tpu.dot_dimension_numbers<[1], [0], [0], [1], [0, 0, 1, 1], [], []>} : vector<8x20xf32>, vector<20x128xf32>, vector<8x128xf32> -> vector<8x128xf32>
    %40 = arith.maximumf %37, %39 : vector<8x128xf32>
    %41 = vector.extract_strided_slice %2 {offsets = [0, 52], sizes = [8, 20], strides = [1, 1]} : vector<8x72xf32> to vector<8x20xf32>
    %cst_17 = arith.constant dense<0.000000e+00> : vector<8x128xf32>
    %42 = tpu.matmul %41, %0, %cst_17 {dimension_numbers = #tpu.dot_dimension_numbers<[1], [0], [0], [1], [0, 0, 1, 1], [], []>} : vector<8x20xf32>, vector<20x128xf32>, vector<8x128xf32> -> vector<8x128xf32>
    %43 = arith.maximumf %40, %42 : vector<8x128xf32>
    %44 = vector.broadcast %1 : vector<1x128xf32> to vector<8x128xf32>
    %45 = arith.addf %43, %44 : vector<8x128xf32>
    %cst_18 = arith.constant 0.000000e+00 : f32
    %46 = vector.broadcast %cst_18 : f32 to vector<8x128xf32>
    %47 = arith.maximumf %45, %46 : vector<8x128xf32>
    %c0_19 = arith.constant 0 : index
    %c0_20 = arith.constant 0 : index
    %48 = vector.load %arg4[%c0_19, %c0_20] : memref<8x128xf32, #tpu.memory_space<vmem>>, vector<8x128xf32>
    tpu.vector_store %arg4[%c0_19, %c0_20], %47 {strides = array<i32>} : memref<8x128xf32, #tpu.memory_space<vmem>>, vector<8x128xf32>,
    return
  }
  func.func @transform_0(%arg0: i32) -> (i32, i32) {
    %c0_i32 = arith.constant 0 : i32
    %c0_i32_0 = arith.constant 0 : i32
    return %arg0, %c0_i32 : i32, i32
  }
  func.func @transform_1(%arg0: i32) -> (i32, i32) {
    %c0_i32 = arith.constant 0 : i32
    %c0_i32_0 = arith.constant 0 : i32
    %c0_i32_1 = arith.constant 0 : i32
    return %c0_i32, %c0_i32_0 : i32, i32
  }
  func.func @transform_2(%arg0: i32) -> (i32, i32) {
    %c0_i32 = arith.constant 0 : i32
    %c0_i32_0 = arith.constant 0 : i32
    %c0_i32_1 = arith.constant 0 : i32
    return %c0_i32, %c0_i32_0 : i32, i32
  }
  func.func @transform_3(%arg0: i32) -> (i32, i32) {
    %c0_i32 = arith.constant 0 : i32
    %c0_i32_0 = arith.constant 0 : i32
    return %arg0, %c0_i32 : i32, i32
  }
}

</mosaic_0001>

<llo_original>
// kernel: tpu_custom_call.1
$region0: #{tpu_custom_call.1}
  #allocation0 [shape = 'u32[]', space=smem, size = 0x4, offset = 0x4, fixed_abs, tag = 'smem constant byte address 0x4 - core index']
  #allocation1 [shape = 'u32[144,128]{1,0:T(1,128)}', space=vmem, size = 0x12000, scoped, tag = 'internal scratch']
  %s0 = inlined_call_operand.hbm [shape: f32[8,72], index: 0, kind: input, shape index: {}]
  %s1 = inlined_call_operand.hbm [shape: f32[20,128], index: 1, kind: input, shape index: {}]
  %s2 = inlined_call_operand.vmem [shape: f32[1,128], index: 2, kind: input, shape index: {}]
  %s3 = inlined_call_operand.hbm [shape: f32[8,128], index: 3, kind: output, shape index: {}]
  %s4 = sld [smem:[#allocation0]]
  $region30: #{tpu_custom_call.1} parent=0
    _
  %s6 = ssub.s32 1, %s4
  %s7 = scalar_select 0, %s6, %s4
  $region1: #{tpu_custom_call.1} parent=0
    #allocation2 [shape = 'u8[4096]{0}', space=vmem, size = 0x1000, scoped, tag = 'input window, operand 0, single buffered']
    #allocation3 [shape = 's32[1]{0}', space=sflag, size = 0x4, scoped, tag = 'scoped memory for tpu_custom_call.1']
    #allocation4 [shape = 's32[1]{0}', space=sflag, size = 0x4, scoped, tag = 'scoped memory for tpu_custom_call.1']
    #allocation5 [shape = 'u8[12288]{0}', space=vmem, size = 0x3000, scoped, tag = 'input window, operand 1, single buffered']
    #allocation6 [shape = 's32[1]{0}', space=sflag, size = 0x4, scoped, tag = 'scoped memory for tpu_custom_call.1']
    #allocation7 [shape = 'u8[4096]{0}', space=vmem, size = 0x1000, scoped, tag = 'output window, operand 0, single buffered']
    %8 = vsyncpa [#allocation3], 0
    %9 = vsyncpa [#allocation6], 0
    %10 = vsyncpa [#allocation4], 0
    // Predicated region
    $region2: #{tpu_custom_call.1} parent=1 // pred_check
      _
    $region3: #{tpu_custom_call.1} parent=1 // pred_check_branch
      %12 = sbr.rel (0) target = $region5
    $region4: #{tpu_custom_call.1} parent=1 // pred_region
      %s14 = ssub.s32 128, 128
      %15 = vsyncadd [#allocation3], %s14
      %s17 = sshll.u32 [#allocation2], 4
      %s18 = int_to_ptr.vmem [resolvable:$true] %s17
      %20 = dma.hbm_to_vmem [thread:$0]  %s0, 128, %s18, [#allocation3]
    $region5: #{tpu_custom_call.1} parent=1 // pred_fallthru
      _
    // Predicated region
    $region6: #{tpu_custom_call.1} parent=1 // pred_check
      _
    $region7: #{tpu_custom_call.1} parent=1 // pred_check_branch
      %22 = sbr.rel (0) target = $region9
    $region8: #{tpu_custom_call.1} parent=1 // pred_region
      %s24 = ssub.s32 384, 384
      %25 = vsyncadd [#allocation6], %s24
      %s26 = sshll.u32 [#allocation5], 4
      %s27 = int_to_ptr.vmem [resolvable:$true] %s26
      %32 = dma.hbm_to_vmem [thread:$0]  %s1, 384, %s27, [#allocation6], 128, 128, 8
    $region9: #{tpu_custom_call.1} parent=1 // pred_fallthru
      _
    // Predicated region
    $region10: #{tpu_custom_call.1} parent=1 // pred_check
      _
    $region11: #{tpu_custom_call.1} parent=1 // pred_check_branch
      %34 = sbr.rel (0) target = $region13
    $region12: #{tpu_custom_call.1} parent=1 // pred_region
      _
    $region13: #{tpu_custom_call.1} parent=1 // pred_fallthru
      _
    // Predicated region
    $region14: #{tpu_custom_call.1} parent=1 // pred_check
      _
    $region15: #{tpu_custom_call.1} parent=1 // pred_check_branch
      %36 = sbr.rel (0) target = $region17
    $region16: #{tpu_custom_call.1} parent=1 // pred_region
      %37 = dma.done [#allocation3], 128
    $region17: #{tpu_custom_call.1} parent=1 // pred_fallthru
      _
    // Predicated region
    $region18: #{tpu_custom_call.1} parent=1 // pred_check
      _
    $region19: #{tpu_custom_call.1} parent=1 // pred_check_branch
      %39 = sbr.rel (0) target = $region21
    $region20: #{tpu_custom_call.1} parent=1 // pred_region
      %40 = dma.done [#allocation6], 384
    $region21: #{tpu_custom_call.1} parent=1 // pred_fallthru
      _
    %v41 = vld [vmem:[#allocation5] sm:$0xff]
    %v42 = vld [vmem:[#allocation5 + $0x8] sm:$0xff]
    %v43 = vld [vmem:[#allocation5 + $0x10] sm:$0xf]
    %v44 = vld [vmem:[%s2] sm:$0x1]
    %v45 = vld [vmem:[#allocation2] sm:$0xff]
    %vm46 = vcmask 162816
    %v48 = vsel %vm46, %v45, 0
    %vm50 = vcmask 1043456
    %v52 = vsel %vm50, %v43, 0
    %54 = vmatprep.subr.mxu0 0.0
    %55 = vmatpush1.msra.mxu0 0.0
    %56 = vmatprep.subr.mxu0 0.0
    %57 = vmatpush1.msra.mxu0 0.0
    %58 = vmatprep.subr.mxu0 0.0
    %59 = vmatpush1.msra.mxu0 0.0
    %60 = vmatprep.subr.mxu0 0.0
    %61 = vmatpush1.msra.mxu0 0.0
    %62 = vmatprep.subr.mxu0 0.0
    %63 = vmatpush1.msra.mxu0 0.0
    %64 = vmatprep.subr.mxu0 0.0
    %65 = vmatpush1.msra.mxu0 0.0
    %66 = vmatprep.subr.mxu0 0.0
    %67 = vmatpush1.msra.mxu0 0.0
    %68 = vmatprep.subr.mxu0 0.0
    %69 = vmatpush1.msra.mxu0 0.0
    %70 = vmatprep.subr.mxu0 0.0
    %71 = vmatpush1.msra.mxu0 0.0
    %72 = vmatprep.subr.mxu0 0.0
    %73 = vmatpush1.msra.mxu0 0.0
    %74 = vmatprep.subr.mxu0 0.0
    %75 = vmatpush1.msra.mxu0 0.0
    %76 = vmatprep.subr.mxu0 0.0
    %77 = vmatpush1.msra.mxu0 0.0
    %78 = vmatprep.subr.mxu0 0.0
    %79 = vmatpush1.msra.mxu0 0.0
    %80 = vmatprep.subr.mxu0 0.0
    %81 = vmatpush1.msra.mxu0 %v52
    %82 = vmatprep.subr.mxu0 0.0
    %83 = vmatpush1.msra.mxu0 %v42
    %84 = vmatprep.subr.mxu0 0.0
    %85 = vmatpush1.msra.mxu0 %v41
    %86 = vmatprep.subr.mxu0 0.0
    %87 = vmatpush2.msra.mxu0 0.0
    %88 = vmatprep.subr.mxu0 0.0
    %89 = vmatpush2.msra.mxu0 0.0
    %90 = vmatprep.subr.mxu0 0.0
    %91 = vmatpush2.msra.mxu0 0.0
    %92 = vmatprep.subr.mxu0 0.0
    %93 = vmatpush2.msra.mxu0 0.0
    %94 = vmatprep.subr.mxu0 0.0
    %95 = vmatpush2.msra.mxu0 0.0
    %96 = vmatprep.subr.mxu0 0.0
    %97 = vmatpush2.msra.mxu0 0.0
    %98 = vmatprep.subr.mxu0 0.0
    %99 = vmatpush2.msra.mxu0 0.0
    %100 = vmatprep.subr.mxu0 0.0
    %101 = vmatpush2.msra.mxu0 0.0
    %102 = vmatprep.subr.mxu0 0.0
    %103 = vmatpush2.msra.mxu0 0.0
    %104 = vmatprep.subr.mxu0 0.0
    %105 = vmatpush2.msra.mxu0 0.0
    %106 = vmatprep.subr.mxu0 0.0
    %107 = vmatpush2.msra.mxu0 0.0
    %108 = vmatprep.subr.mxu0 0.0
    %109 = vmatpush2.msra.mxu0 0.0
    %110 = vmatprep.subr.mxu0 0.0
    %111 = vmatpush2.msra.mxu0 0.0
    %112 = vmatprep.subr.mxu0 0.0
    %113 = vmatpush2.msra.mxu0 0.0
    %114 = vmatprep.subr.mxu0 0.0
    %115 = vmatpush2.msra.mxu0 0.0
    %116 = vmatprep.subr.mxu0 0.0
    %117 = vmatpush2.msra.mxu0 0.0
    %118 = vmatprep.mubr.f32.mxu0 0.0
    %119 = vmatmul.mubr.f32.gmra.mxu0 %v48
    %v120 = vpop.f32.mrf.mxu0
    %v121 = vadd.f32 0.0, %v120
    %v122 = vpop.f32.mrf.mxu0
    %123 = vdwg.mxu0
    %124 = vrot.lane.b32.xlu0 %v45, 124
    %v125 = vpop.permute.xlu0 %124
    %v126 = vsel %vm46, %v125, 0
    %128 = vmatprep.subr.mxu0 0.0
    %129 = vmatpush1.msra.mxu0 0.0
    %130 = vmatprep.subr.mxu0 0.0
    %131 = vmatpush1.msra.mxu0 0.0
    %132 = vmatprep.subr.mxu0 0.0
    %133 = vmatpush1.msra.mxu0 0.0
    %134 = vmatprep.subr.mxu0 0.0
    %135 = vmatpush1.msra.mxu0 0.0
    %136 = vmatprep.subr.mxu0 0.0
    %137 = vmatpush1.msra.mxu0 0.0
    %138 = vmatprep.subr.mxu0 0.0
    %139 = vmatpush1.msra.mxu0 0.0
    %140 = vmatprep.subr.mxu0 0.0
    %141 = vmatpush1.msra.mxu0 0.0
    %142 = vmatprep.subr.mxu0 0.0
    %143 = vmatpush1.msra.mxu0 0.0
    %144 = vmatprep.subr.mxu0 0.0
    %145 = vmatpush1.msra.mxu0 0.0
    %146 = vmatprep.subr.mxu0 0.0
    %147 = vmatpush1.msra.mxu0 0.0
    %148 = vmatprep.subr.mxu0 0.0
    %149 = vmatpush1.msra.mxu0 0.0
    %150 = vmatprep.subr.mxu0 0.0
    %151 = vmatpush1.msra.mxu0 0.0
    %152 = vmatprep.subr.mxu0 0.0
    %153 = vmatpush1.msra.mxu0 0.0
    %154 = vmatprep.subr.mxu0 0.0
    %155 = vmatpush1.msra.mxu0 %v52
    %156 = vmatprep.subr.mxu0 0.0
    %157 = vmatpush1.msra.mxu0 %v42
    %158 = vmatprep.subr.mxu0 0.0
    %159 = vmatpush1.msra.mxu0 %v41
    %160 = vmatprep.subr.mxu0 0.0
    %161 = vmatpush2.msra.mxu0 0.0
    %162 = vmatprep.subr.mxu0 0.0
    %163 = vmatpush2.msra.mxu0 0.0
    %164 = vmatprep.subr.mxu0 0.0
    %165 = vmatpush2.msra.mxu0 0.0
    %166 = vmatprep.subr.mxu0 0.0
    %167 = vmatpush2.msra.mxu0 0.0
    %168 = vmatprep.subr.mxu0 0.0
    %169 = vmatpush2.msra.mxu0 0.0
    %170 = vmatprep.subr.mxu0 0.0
    %171 = vmatpush2.msra.mxu0 0.0
    %172 = vmatprep.subr.mxu0 0.0
    %173 = vmatpush2.msra.mxu0 0.0
    %174 = vmatprep.subr.mxu0 0.0
    %175 = vmatpush2.msra.mxu0 0.0
    %176 = vmatprep.subr.mxu0 0.0
    %177 = vmatpush2.msra.mxu0 0.0
    %178 = vmatprep.subr.mxu0 0.0
    %179 = vmatpush2.msra.mxu0 0.0
    %180 = vmatprep.subr.mxu0 0.0
    %181 = vmatpush2.msra.mxu0 0.0
    %182 = vmatprep.subr.mxu0 0.0
    %183 = vmatpush2.msra.mxu0 0.0
    %184 = vmatprep.subr.mxu0 0.0
    %185 = vmatpush2.msra.mxu0 0.0
    %186 = vmatprep.subr.mxu0 0.0
    %187 = vmatpush2.msra.mxu0 0.0
    %188 = vmatprep.subr.mxu0 0.0
    %189 = vmatpush2.msra.mxu0 0.0
    %190 = vmatprep.subr.mxu0 0.0
    %191 = vmatpush2.msra.mxu0 0.0
    %192 = vmatprep.mubr.f32.mxu0 0.0
    %193 = vmatmul.mubr.f32.gmra.mxu0 %v126
    %v194 = vpop.f32.mrf.mxu0
    %v195 = vadd.f32 0.0, %v194
    %v196 = vpop.f32.mrf.mxu0
    %197 = vdwg.mxu0
    %v198 = vmax.f32 %v121, %v195
    %199 = vrot.lane.b32.xlu0 %v45, 120
    %v200 = vpop.permute.xlu0 %199
    %v201 = vsel %vm46, %v200, 0
    %203 = vmatprep.subr.mxu0 0.0
    %204 = vmatpush1.msra.mxu0 0.0
    %205 = vmatprep.subr.mxu0 0.0
    %206 = vmatpush1.msra.mxu0 0.0
    %207 = vmatprep.subr.mxu0 0.0
    %208 = vmatpush1.msra.mxu0 0.0
    %209 = vmatprep.subr.mxu0 0.0
    %210 = vmatpush1.msra.mxu0 0.0
    %211 = vmatprep.subr.mxu0 0.0
    %212 = vmatpush1.msra.mxu0 0.0
    %213 = vmatprep.subr.mxu0 0.0
    %214 = vmatpush1.msra.mxu0 0.0
    %215 = vmatprep.subr.mxu0 0.0
    %216 = vmatpush1.msra.mxu0 0.0
    %217 = vmatprep.subr.mxu0 0.0
    %218 = vmatpush1.msra.mxu0 0.0
    %219 = vmatprep.subr.mxu0 0.0
    %220 = vmatpush1.msra.mxu0 0.0
    %221 = vmatprep.subr.mxu0 0.0
    %222 = vmatpush1.msra.mxu0 0.0
    %223 = vmatprep.subr.mxu0 0.0
    %224 = vmatpush1.msra.mxu0 0.0
    %225 = vmatprep.subr.mxu0 0.0
    %226 = vmatpush1.msra.mxu0 0.0
    %227 = vmatprep.subr.mxu0 0.0
    %228 = vmatpush1.msra.mxu0 0.0
    %229 = vmatprep.subr.mxu0 0.0
    %230 = vmatpush1.msra.mxu0 %v52
    %231 = vmatprep.subr.mxu0 0.0
    %232 = vmatpush1.msra.mxu0 %v42
    %233 = vmatprep.subr.mxu0 0.0
    %234 = vmatpush1.msra.mxu0 %v41
    %235 = vmatprep.subr.mxu0 0.0
    %236 = vmatpush2.msra.mxu0 0.0
    %237 = vmatprep.subr.mxu0 0.0
    %238 = vmatpush2.msra.mxu0 0.0
    %239 = vmatprep.subr.mxu0 0.0
    %240 = vmatpush2.msra.mxu0 0.0
    %241 = vmatprep.subr.mxu0 0.0
    %242 = vmatpush2.msra.mxu0 0.0
    %243 = vmatprep.subr.mxu0 0.0
    %244 = vmatpush2.msra.mxu0 0.0
    %245 = vmatprep.subr.mxu0 0.0
    %246 = vmatpush2.msra.mxu0 0.0
    %247 = vmatprep.subr.mxu0 0.0
    %248 = vmatpush2.msra.mxu0 0.0
    %249 = vmatprep.subr.mxu0 0.0
    %250 = vmatpush2.msra.mxu0 0.0
    %251 = vmatprep.subr.mxu0 0.0
    %252 = vmatpush2.msra.mxu0 0.0
    %253 = vmatprep.subr.mxu0 0.0
    %254 = vmatpush2.msra.mxu0 0.0
    %255 = vmatprep.subr.mxu0 0.0
    %256 = vmatpush2.msra.mxu0 0.0
    %257 = vmatprep.subr.mxu0 0.0
    %258 = vmatpush2.msra.mxu0 0.0
    %259 = vmatprep.subr.mxu0 0.0
    %260 = vmatpush2.msra.mxu0 0.0
    %261 = vmatprep.subr.mxu0 0.0
    %262 = vmatpush2.msra.mxu0 0.0
    %263 = vmatprep.subr.mxu0 0.0
    %264 = vmatpush2.msra.mxu0 0.0
    %265 = vmatprep.subr.mxu0 0.0
    %266 = vmatpush2.msra.mxu0 0.0
    %267 = vmatprep.mubr.f32.mxu0 0.0
    %268 = vmatmul.mubr.f32.gmra.mxu0 %v201
    %v269 = vpop.f32.mrf.mxu0
    %v270 = vadd.f32 0.0, %v269
    %v271 = vpop.f32.mrf.mxu0
    %272 = vdwg.mxu0
    %v273 = vmax.f32 %v198, %v270
    %274 = vrot.lane.b32.xlu0 %v45, 116
    %v275 = vpop.permute.xlu0 %274
    %v276 = vsel %vm46, %v275, 0
    %278 = vmatprep.subr.mxu0 0.0
    %279 = vmatpush1.msra.mxu0 0.0
    %280 = vmatprep.subr.mxu0 0.0
    %281 = vmatpush1.msra.mxu0 0.0
    %282 = vmatprep.subr.mxu0 0.0
    %283 = vmatpush1.msra.mxu0 0.0
    %284 = vmatprep.subr.mxu0 0.0
    %285 = vmatpush1.msra.mxu0 0.0
    %286 = vmatprep.subr.mxu0 0.0
    %287 = vmatpush1.msra.mxu0 0.0
    %288 = vmatprep.subr.mxu0 0.0
    %289 = vmatpush1.msra.mxu0 0.0
    %290 = vmatprep.subr.mxu0 0.0
    %291 = vmatpush1.msra.mxu0 0.0
    %292 = vmatprep.subr.mxu0 0.0
    %293 = vmatpush1.msra.mxu0 0.0
    %294 = vmatprep.subr.mxu0 0.0
    %295 = vmatpush1.msra.mxu0 0.0
    %296 = vmatprep.subr.mxu0 0.0
    %297 = vmatpush1.msra.mxu0 0.0
    %298 = vmatprep.subr.mxu0 0.0
    %299 = vmatpush1.msra.mxu0 0.0
    %300 = vmatprep.subr.mxu0 0.0
    %301 = vmatpush1.msra.mxu0 0.0
    %302 = vmatprep.subr.mxu0 0.0
    %303 = vmatpush1.msra.mxu0 0.0
    %304 = vmatprep.subr.mxu0 0.0
    %305 = vmatpush1.msra.mxu0 %v52
    %306 = vmatprep.subr.mxu0 0.0
    %307 = vmatpush1.msra.mxu0 %v42
    %308 = vmatprep.subr.mxu0 0.0
    %309 = vmatpush1.msra.mxu0 %v41
    %310 = vmatprep.subr.mxu0 0.0
    %311 = vmatpush2.msra.mxu0 0.0
    %312 = vmatprep.subr.mxu0 0.0
    %313 = vmatpush2.msra.mxu0 0.0
    %314 = vmatprep.subr.mxu0 0.0
    %315 = vmatpush2.msra.mxu0 0.0
    %316 = vmatprep.subr.mxu0 0.0
    %317 = vmatpush2.msra.mxu0 0.0
    %318 = vmatprep.subr.mxu0 0.0
    %319 = vmatpush2.msra.mxu0 0.0
    %320 = vmatprep.subr.mxu0 0.0
    %321 = vmatpush2.msra.mxu0 0.0
    %322 = vmatprep.subr.mxu0 0.0
    %323 = vmatpush2.msra.mxu0 0.0
    %324 = vmatprep.subr.mxu0 0.0
    %325 = vmatpush2.msra.mxu0 0.0
    %326 = vmatprep.subr.mxu0 0.0
    %327 = vmatpush2.msra.mxu0 0.0
    %328 = vmatprep.subr.mxu0 0.0
    %329 = vmatpush2.msra.mxu0 0.0
    %330 = vmatprep.subr.mxu0 0.0
    %331 = vmatpush2.msra.mxu0 0.0
    %332 = vmatprep.subr.mxu0 0.0
    %333 = vmatpush2.msra.mxu0 0.0
    %334 = vmatprep.subr.mxu0 0.0
    %335 = vmatpush2.msra.mxu0 0.0
    %336 = vmatprep.subr.mxu0 0.0
    %337 = vmatpush2.msra.mxu0 0.0
    %338 = vmatprep.subr.mxu0 0.0
    %339 = vmatpush2.msra.mxu0 0.0
    %340 = vmatprep.subr.mxu0 0.0
    %341 = vmatpush2.msra.mxu0 0.0
    %342 = vmatprep.mubr.f32.mxu0 0.0
    %343 = vmatmul.mubr.f32.gmra.mxu0 %v276
    %v344 = vpop.f32.mrf.mxu0
    %v345 = vadd.f32 0.0, %v344
    %v346 = vpop.f32.mrf.mxu0
    %347 = vdwg.mxu0
    %v348 = vmax.f32 %v273, %v345
    %349 = vrot.lane.b32.xlu0 %v45, 112
    %v350 = vpop.permute.xlu0 %349
    %v351 = vsel %vm46, %v350, 0
    %353 = vmatprep.subr.mxu0 0.0
    %354 = vmatpush1.msra.mxu0 0.0
    %355 = vmatprep.subr.mxu0 0.0
    %356 = vmatpush1.msra.mxu0 0.0
    %357 = vmatprep.subr.mxu0 0.0
    %358 = vmatpush1.msra.mxu0 0.0
    %359 = vmatprep.subr.mxu0 0.0
    %360 = vmatpush1.msra.mxu0 0.0
    %361 = vmatprep.subr.mxu0 0.0
    %362 = vmatpush1.msra.mxu0 0.0
    %363 = vmatprep.subr.mxu0 0.0
    %364 = vmatpush1.msra.mxu0 0.0
    %365 = vmatprep.subr.mxu0 0.0
    %366 = vmatpush1.msra.mxu0 0.0
    %367 = vmatprep.subr.mxu0 0.0
    %368 = vmatpush1.msra.mxu0 0.0
    %369 = vmatprep.subr.mxu0 0.0
    %370 = vmatpush1.msra.mxu0 0.0
    %371 = vmatprep.subr.mxu0 0.0
    %372 = vmatpush1.msra.mxu0 0.0
    %373 = vmatprep.subr.mxu0 0.0
    %374 = vmatpush1.msra.mxu0 0.0
    %375 = vmatprep.subr.mxu0 0.0
    %376 = vmatpush1.msra.mxu0 0.0
    %377 = vmatprep.subr.mxu0 0.0
    %378 = vmatpush1.msra.mxu0 0.0
    %379 = vmatprep.subr.mxu0 0.0
    %380 = vmatpush1.msra.mxu0 %v52
    %381 = vmatprep.subr.mxu0 0.0
    %382 = vmatpush1.msra.mxu0 %v42
    %383 = vmatprep.subr.mxu0 0.0
    %384 = vmatpush1.msra.mxu0 %v41
    %385 = vmatprep.subr.mxu0 0.0
    %386 = vmatpush2.msra.mxu0 0.0
    %387 = vmatprep.subr.mxu0 0.0
    %388 = vmatpush2.msra.mxu0 0.0
    %389 = vmatprep.subr.mxu0 0.0
    %390 = vmatpush2.msra.mxu0 0.0
    %391 = vmatprep.subr.mxu0 0.0
    %392 = vmatpush2.msra.mxu0 0.0
    %393 = vmatprep.subr.mxu0 0.0
    %394 = vmatpush2.msra.mxu0 0.0
    %395 = vmatprep.subr.mxu0 0.0
    %396 = vmatpush2.msra.mxu0 0.0
    %397 = vmatprep.subr.mxu0 0.0
    %398 = vmatpush2.msra.mxu0 0.0
    %399 = vmatprep.subr.mxu0 0.0
    %400 = vmatpush2.msra.mxu0 0.0
    %401 = vmatprep.subr.mxu0 0.0
    %402 = vmatpush2.msra.mxu0 0.0
    %403 = vmatprep.subr.mxu0 0.0
    %404 = vmatpush2.msra.mxu0 0.0
    %405 = vmatprep.subr.mxu0 0.0
    %406 = vmatpush2.msra.mxu0 0.0
    %407 = vmatprep.subr.mxu0 0.0
    %408 = vmatpush2.msra.mxu0 0.0
    %409 = vmatprep.subr.mxu0 0.0
    %410 = vmatpush2.msra.mxu0 0.0
    %411 = vmatprep.subr.mxu0 0.0
    %412 = vmatpush2.msra.mxu0 0.0
    %413 = vmatprep.subr.mxu0 0.0
    %414 = vmatpush2.msra.mxu0 0.0
    %415 = vmatprep.subr.mxu0 0.0
    %416 = vmatpush2.msra.mxu0 0.0
    %417 = vmatprep.mubr.f32.mxu0 0.0
    %418 = vmatmul.mubr.f32.gmra.mxu0 %v351
    %v419 = vpop.f32.mrf.mxu0
    %v420 = vadd.f32 0.0, %v419
    %v421 = vpop.f32.mrf.mxu0
    %422 = vdwg.mxu0
    %v423 = vmax.f32 %v348, %v420
    %424 = vrot.lane.b32.xlu0 %v45, 108
    %v425 = vpop.permute.xlu0 %424
    %v426 = vsel %vm46, %v425, 0
    %428 = vmatprep.subr.mxu0 0.0
    %429 = vmatpush1.msra.mxu0 0.0
    %430 = vmatprep.subr.mxu0 0.0
    %431 = vmatpush1.msra.mxu0 0.0
    %432 = vmatprep.subr.mxu0 0.0
    %433 = vmatpush1.msra.mxu0 0.0
    %434 = vmatprep.subr.mxu0 0.0
    %435 = vmatpush1.msra.mxu0 0.0
    %436 = vmatprep.subr.mxu0 0.0
    %437 = vmatpush1.msra.mxu0 0.0
    %438 = vmatprep.subr.mxu0 0.0
    %439 = vmatpush1.msra.mxu0 0.0
    %440 = vmatprep.subr.mxu0 0.0
    %441 = vmatpush1.msra.mxu0 0.0
    %442 = vmatprep.subr.mxu0 0.0
    %443 = vmatpush1.msra.mxu0 0.0
    %444 = vmatprep.subr.mxu0 0.0
    %445 = vmatpush1.msra.mxu0 0.0
    %446 = vmatprep.subr.mxu0 0.0
    %447 = vmatpush1.msra.mxu0 0.0
    %448 = vmatprep.subr.mxu0 0.0
    %449 = vmatpush1.msra.mxu0 0.0
    %450 = vmatprep.subr.mxu0 0.0
    %451 = vmatpush1.msra.mxu0 0.0
    %452 = vmatprep.subr.mxu0 0.0
    %453 = vmatpush1.msra.mxu0 0.0
    %454 = vmatprep.subr.mxu0 0.0
    %455 = vmatpush1.msra.mxu0 %v52
    %456 = vmatprep.subr.mxu0 0.0
    %457 = vmatpush1.msra.mxu0 %v42
    %458 = vmatprep.subr.mxu0 0.0
    %459 = vmatpush1.msra.mxu0 %v41
    %460 = vmatprep.subr.mxu0 0.0
    %461 = vmatpush2.msra.mxu0 0.0
    %462 = vmatprep.subr.mxu0 0.0
    %463 = vmatpush2.msra.mxu0 0.0
    %464 = vmatprep.subr.mxu0 0.0
    %465 = vmatpush2.msra.mxu0 0.0
    %466 = vmatprep.subr.mxu0 0.0
    %467 = vmatpush2.msra.mxu0 0.0
    %468 = vmatprep.subr.mxu0 0.0
    %469 = vmatpush2.msra.mxu0 0.0
    %470 = vmatprep.subr.mxu0 0.0
    %471 = vmatpush2.msra.mxu0 0.0
    %472 = vmatprep.subr.mxu0 0.0
    %473 = vmatpush2.msra.mxu0 0.0
    %474 = vmatprep.subr.mxu0 0.0
    %475 = vmatpush2.msra.mxu0 0.0
    %476 = vmatprep.subr.mxu0 0.0
    %477 = vmatpush2.msra.mxu0 0.0
    %478 = vmatprep.subr.mxu0 0.0
    %479 = vmatpush2.msra.mxu0 0.0
    %480 = vmatprep.subr.mxu0 0.0
    %481 = vmatpush2.msra.mxu0 0.0
    %482 = vmatprep.subr.mxu0 0.0
    %483 = vmatpush2.msra.mxu0 0.0
    %484 = vmatprep.subr.mxu0 0.0
    %485 = vmatpush2.msra.mxu0 0.0
    %486 = vmatprep.subr.mxu0 0.0
    %487 = vmatpush2.msra.mxu0 0.0
    %488 = vmatprep.subr.mxu0 0.0
    %489 = vmatpush2.msra.mxu0 0.0
    %490 = vmatprep.subr.mxu0 0.0
    %491 = vmatpush2.msra.mxu0 0.0
    %492 = vmatprep.mubr.f32.mxu0 0.0
    %493 = vmatmul.mubr.f32.gmra.mxu0 %v426
    %v494 = vpop.f32.mrf.mxu0
    %v495 = vadd.f32 0.0, %v494
    %v496 = vpop.f32.mrf.mxu0
    %497 = vdwg.mxu0
    %v498 = vmax.f32 %v423, %v495
    %499 = vrot.lane.b32.xlu0 %v45, 104
    %v500 = vpop.permute.xlu0 %499
    %v501 = vsel %vm46, %v500, 0
    %503 = vmatprep.subr.mxu0 0.0
    %504 = vmatpush1.msra.mxu0 0.0
    %505 = vmatprep.subr.mxu0 0.0
    %506 = vmatpush1.msra.mxu0 0.0
    %507 = vmatprep.subr.mxu0 0.0
    %508 = vmatpush1.msra.mxu0 0.0
    %509 = vmatprep.subr.mxu0 0.0
    %510 = vmatpush1.msra.mxu0 0.0
    %511 = vmatprep.subr.mxu0 0.0
    %512 = vmatpush1.msra.mxu0 0.0
    %513 = vmatprep.subr.mxu0 0.0
    %514 = vmatpush1.msra.mxu0 0.0
    %515 = vmatprep.subr.mxu0 0.0
    %516 = vmatpush1.msra.mxu0 0.0
    %517 = vmatprep.subr.mxu0 0.0
    %518 = vmatpush1.msra.mxu0 0.0
    %519 = vmatprep.subr.mxu0 0.0
    %520 = vmatpush1.msra.mxu0 0.0
    %521 = vmatprep.subr.mxu0 0.0
    %522 = vmatpush1.msra.mxu0 0.0
    %523 = vmatprep.subr.mxu0 0.0
    %524 = vmatpush1.msra.mxu0 0.0
    %525 = vmatprep.subr.mxu0 0.0
    %526 = vmatpush1.msra.mxu0 0.0
    %527 = vmatprep.subr.mxu0 0.0
    %528 = vmatpush1.msra.mxu0 0.0
    %529 = vmatprep.subr.mxu0 0.0
    %530 = vmatpush1.msra.mxu0 %v52
    %531 = vmatprep.subr.mxu0 0.0
    %532 = vmatpush1.msra.mxu0 %v42
    %533 = vmatprep.subr.mxu0 0.0
    %534 = vmatpush1.msra.mxu0 %v41
    %535 = vmatprep.subr.mxu0 0.0
    %536 = vmatpush2.msra.mxu0 0.0
    %537 = vmatprep.subr.mxu0 0.0
    %538 = vmatpush2.msra.mxu0 0.0
    %539 = vmatprep.subr.mxu0 0.0
    %540 = vmatpush2.msra.mxu0 0.0
    %541 = vmatprep.subr.mxu0 0.0
    %542 = vmatpush2.msra.mxu0 0.0
    %543 = vmatprep.subr.mxu0 0.0
    %544 = vmatpush2.msra.mxu0 0.0
    %545 = vmatprep.subr.mxu0 0.0
    %546 = vmatpush2.msra.mxu0 0.0
    %547 = vmatprep.subr.mxu0 0.0
    %548 = vmatpush2.msra.mxu0 0.0
    %549 = vmatprep.subr.mxu0 0.0
    %550 = vmatpush2.msra.mxu0 0.0
    %551 = vmatprep.subr.mxu0 0.0
    %552 = vmatpush2.msra.mxu0 0.0
    %553 = vmatprep.subr.mxu0 0.0
    %554 = vmatpush2.msra.mxu0 0.0
    %555 = vmatprep.subr.mxu0 0.0
    %556 = vmatpush2.msra.mxu0 0.0
    %557 = vmatprep.subr.mxu0 0.0
    %558 = vmatpush2.msra.mxu0 0.0
    %559 = vmatprep.subr.mxu0 0.0
    %560 = vmatpush2.msra.mxu0 0.0
    %561 = vmatprep.subr.mxu0 0.0
    %562 = vmatpush2.msra.mxu0 0.0
    %563 = vmatprep.subr.mxu0 0.0
    %564 = vmatpush2.msra.mxu0 0.0
    %565 = vmatprep.subr.mxu0 0.0
    %566 = vmatpush2.msra.mxu0 0.0
    %567 = vmatprep.mubr.f32.mxu0 0.0
    %568 = vmatmul.mubr.f32.gmra.mxu0 %v501
    %v569 = vpop.f32.mrf.mxu0
    %v570 = vadd.f32 0.0, %v569
    %v571 = vpop.f32.mrf.mxu0
    %572 = vdwg.mxu0
    %v573 = vmax.f32 %v498, %v570
    %574 = vrot.lane.b32.xlu0 %v45, 100
    %v575 = vpop.permute.xlu0 %574
    %v576 = vsel %vm46, %v575, 0
    %578 = vmatprep.subr.mxu0 0.0
    %579 = vmatpush1.msra.mxu0 0.0
    %580 = vmatprep.subr.mxu0 0.0
    %581 = vmatpush1.msra.mxu0 0.0
    %582 = vmatprep.subr.mxu0 0.0
    %583 = vmatpush1.msra.mxu0 0.0
    %584 = vmatprep.subr.mxu0 0.0
    %585 = vmatpush1.msra.mxu0 0.0
    %586 = vmatprep.subr.mxu0 0.0
    %587 = vmatpush1.msra.mxu0 0.0
    %588 = vmatprep.subr.mxu0 0.0
    %589 = vmatpush1.msra.mxu0 0.0
    %590 = vmatprep.subr.mxu0 0.0
    %591 = vmatpush1.msra.mxu0 0.0
    %592 = vmatprep.subr.mxu0 0.0
    %593 = vmatpush1.msra.mxu0 0.0
    %594 = vmatprep.subr.mxu0 0.0
    %595 = vmatpush1.msra.mxu0 0.0
    %596 = vmatprep.subr.mxu0 0.0
    %597 = vmatpush1.msra.mxu0 0.0
    %598 = vmatprep.subr.mxu0 0.0
    %599 = vmatpush1.msra.mxu0 0.0
    %600 = vmatprep.subr.mxu0 0.0
    %601 = vmatpush1.msra.mxu0 0.0
    %602 = vmatprep.subr.mxu0 0.0
    %603 = vmatpush1.msra.mxu0 0.0
    %604 = vmatprep.subr.mxu0 0.0
    %605 = vmatpush1.msra.mxu0 %v52
    %606 = vmatprep.subr.mxu0 0.0
    %607 = vmatpush1.msra.mxu0 %v42
    %608 = vmatprep.subr.mxu0 0.0
    %609 = vmatpush1.msra.mxu0 %v41
    %610 = vmatprep.subr.mxu0 0.0
    %611 = vmatpush2.msra.mxu0 0.0
    %612 = vmatprep.subr.mxu0 0.0
    %613 = vmatpush2.msra.mxu0 0.0
    %614 = vmatprep.subr.mxu0 0.0
    %615 = vmatpush2.msra.mxu0 0.0
    %616 = vmatprep.subr.mxu0 0.0
    %617 = vmatpush2.msra.mxu0 0.0
    %618 = vmatprep.subr.mxu0 0.0
    %619 = vmatpush2.msra.mxu0 0.0
    %620 = vmatprep.subr.mxu0 0.0
    %621 = vmatpush2.msra.mxu0 0.0
    %622 = vmatprep.subr.mxu0 0.0
    %623 = vmatpush2.msra.mxu0 0.0
    %624 = vmatprep.subr.mxu0 0.0
    %625 = vmatpush2.msra.mxu0 0.0
    %626 = vmatprep.subr.mxu0 0.0
    %627 = vmatpush2.msra.mxu0 0.0
    %628 = vmatprep.subr.mxu0 0.0
    %629 = vmatpush2.msra.mxu0 0.0
    %630 = vmatprep.subr.mxu0 0.0
    %631 = vmatpush2.msra.mxu0 0.0
    %632 = vmatprep.subr.mxu0 0.0
    %633 = vmatpush2.msra.mxu0 0.0
    %634 = vmatprep.subr.mxu0 0.0
    %635 = vmatpush2.msra.mxu0 0.0
    %636 = vmatprep.subr.mxu0 0.0
    %637 = vmatpush2.msra.mxu0 0.0
    %638 = vmatprep.subr.mxu0 0.0
    %639 = vmatpush2.msra.mxu0 0.0
    %640 = vmatprep.subr.mxu0 0.0
    %641 = vmatpush2.msra.mxu0 0.0
    %642 = vmatprep.mubr.f32.mxu0 0.0
    %643 = vmatmul.mubr.f32.gmra.mxu0 %v576
    %v644 = vpop.f32.mrf.mxu0
    %v645 = vadd.f32 0.0, %v644
    %v646 = vpop.f32.mrf.mxu0
    %647 = vdwg.mxu0
    %v648 = vmax.f32 %v573, %v645
    %649 = vrot.lane.b32.xlu0 %v45, 96
    %v650 = vpop.permute.xlu0 %649
    %v651 = vsel %vm46, %v650, 0
    %653 = vmatprep.subr.mxu0 0.0
    %654 = vmatpush1.msra.mxu0 0.0
    %655 = vmatprep.subr.mxu0 0.0
    %656 = vmatpush1.msra.mxu0 0.0
    %657 = vmatprep.subr.mxu0 0.0
    %658 = vmatpush1.msra.mxu0 0.0
    %659 = vmatprep.subr.mxu0 0.0
    %660 = vmatpush1.msra.mxu0 0.0
    %661 = vmatprep.subr.mxu0 0.0
    %662 = vmatpush1.msra.mxu0 0.0
    %663 = vmatprep.subr.mxu0 0.0
    %664 = vmatpush1.msra.mxu0 0.0
    %665 = vmatprep.subr.mxu0 0.0
    %666 = vmatpush1.msra.mxu0 0.0
    %667 = vmatprep.subr.mxu0 0.0
    %668 = vmatpush1.msra.mxu0 0.0
    %669 = vmatprep.subr.mxu0 0.0
    %670 = vmatpush1.msra.mxu0 0.0
    %671 = vmatprep.subr.mxu0 0.0
    %672 = vmatpush1.msra.mxu0 0.0
    %673 = vmatprep.subr.mxu0 0.0
    %674 = vmatpush1.msra.mxu0 0.0
    %675 = vmatprep.subr.mxu0 0.0
    %676 = vmatpush1.msra.mxu0 0.0
    %677 = vmatprep.subr.mxu0 0.0
    %678 = vmatpush1.msra.mxu0 0.0
    %679 = vmatprep.subr.mxu0 0.0
    %680 = vmatpush1.msra.mxu0 %v52
    %681 = vmatprep.subr.mxu0 0.0
    %682 = vmatpush1.msra.mxu0 %v42
    %683 = vmatprep.subr.mxu0 0.0
    %684 = vmatpush1.msra.mxu0 %v41
    %685 = vmatprep.subr.mxu0 0.0
    %686 = vmatpush2.msra.mxu0 0.0
    %687 = vmatprep.subr.mxu0 0.0
    %688 = vmatpush2.msra.mxu0 0.0
    %689 = vmatprep.subr.mxu0 0.0
    %690 = vmatpush2.msra.mxu0 0.0
    %691 = vmatprep.subr.mxu0 0.0
    %692 = vmatpush2.msra.mxu0 0.0
    %693 = vmatprep.subr.mxu0 0.0
    %694 = vmatpush2.msra.mxu0 0.0
    %695 = vmatprep.subr.mxu0 0.0
    %696 = vmatpush2.msra.mxu0 0.0
    %697 = vmatprep.subr.mxu0 0.0
    %698 = vmatpush2.msra.mxu0 0.0
    %699 = vmatprep.subr.mxu0 0.0
    %700 = vmatpush2.msra.mxu0 0.0
    %701 = vmatprep.subr.mxu0 0.0
    %702 = vmatpush2.msra.mxu0 0.0
    %703 = vmatprep.subr.mxu0 0.0
    %704 = vmatpush2.msra.mxu0 0.0
    %705 = vmatprep.subr.mxu0 0.0
    %706 = vmatpush2.msra.mxu0 0.0
    %707 = vmatprep.subr.mxu0 0.0
    %708 = vmatpush2.msra.mxu0 0.0
    %709 = vmatprep.subr.mxu0 0.0
    %710 = vmatpush2.msra.mxu0 0.0
    %711 = vmatprep.subr.mxu0 0.0
    %712 = vmatpush2.msra.mxu0 0.0
    %713 = vmatprep.subr.mxu0 0.0
    %714 = vmatpush2.msra.mxu0 0.0
    %715 = vmatprep.subr.mxu0 0.0
    %716 = vmatpush2.msra.mxu0 0.0
    %717 = vmatprep.mubr.f32.mxu0 0.0
    %718 = vmatmul.mubr.f32.gmra.mxu0 %v651
    %v719 = vpop.f32.mrf.mxu0
    %v720 = vadd.f32 0.0, %v719
    %v721 = vpop.f32.mrf.mxu0
    %722 = vdwg.mxu0
    %v723 = vmax.f32 %v648, %v720
    %724 = vrot.lane.b32.xlu0 %v45, 92
    %v725 = vpop.permute.xlu0 %724
    %v726 = vsel %vm46, %v725, 0
    %728 = vmatprep.subr.mxu0 0.0
    %729 = vmatpush1.msra.mxu0 0.0
    %730 = vmatprep.subr.mxu0 0.0
    %731 = vmatpush1.msra.mxu0 0.0
    %732 = vmatprep.subr.mxu0 0.0
    %733 = vmatpush1.msra.mxu0 0.0
    %734 = vmatprep.subr.mxu0 0.0
    %735 = vmatpush1.msra.mxu0 0.0
    %736 = vmatprep.subr.mxu0 0.0
    %737 = vmatpush1.msra.mxu0 0.0
    %738 = vmatprep.subr.mxu0 0.0
    %739 = vmatpush1.msra.mxu0 0.0
    %740 = vmatprep.subr.mxu0 0.0
    %741 = vmatpush1.msra.mxu0 0.0
    %742 = vmatprep.subr.mxu0 0.0
    %743 = vmatpush1.msra.mxu0 0.0
    %744 = vmatprep.subr.mxu0 0.0
    %745 = vmatpush1.msra.mxu0 0.0
    %746 = vmatprep.subr.mxu0 0.0
    %747 = vmatpush1.msra.mxu0 0.0
    %748 = vmatprep.subr.mxu0 0.0
    %749 = vmatpush1.msra.mxu0 0.0
    %750 = vmatprep.subr.mxu0 0.0
    %751 = vmatpush1.msra.mxu0 0.0
    %752 = vmatprep.subr.mxu0 0.0
    %753 = vmatpush1.msra.mxu0 0.0
    %754 = vmatprep.subr.mxu0 0.0
    %755 = vmatpush1.msra.mxu0 %v52
    %756 = vmatprep.subr.mxu0 0.0
    %757 = vmatpush1.msra.mxu0 %v42
    %758 = vmatprep.subr.mxu0 0.0
    %759 = vmatpush1.msra.mxu0 %v41
    %760 = vmatprep.subr.mxu0 0.0
    %761 = vmatpush2.msra.mxu0 0.0
    %762 = vmatprep.subr.mxu0 0.0
    %763 = vmatpush2.msra.mxu0 0.0
    %764 = vmatprep.subr.mxu0 0.0
    %765 = vmatpush2.msra.mxu0 0.0
    %766 = vmatprep.subr.mxu0 0.0
    %767 = vmatpush2.msra.mxu0 0.0
    %768 = vmatprep.subr.mxu0 0.0
    %769 = vmatpush2.msra.mxu0 0.0
    %770 = vmatprep.subr.mxu0 0.0
    %771 = vmatpush2.msra.mxu0 0.0
    %772 = vmatprep.subr.mxu0 0.0
    %773 = vmatpush2.msra.mxu0 0.0
    %774 = vmatprep.subr.mxu0 0.0
    %775 = vmatpush2.msra.mxu0 0.0
    %776 = vmatprep.subr.mxu0 0.0
    %777 = vmatpush2.msra.mxu0 0.0
    %778 = vmatprep.subr.mxu0 0.0
    %779 = vmatpush2.msra.mxu0 0.0
    %780 = vmatprep.subr.mxu0 0.0
    %781 = vmatpush2.msra.mxu0 0.0
    %782 = vmatprep.subr.mxu0 0.0
    %783 = vmatpush2.msra.mxu0 0.0
    %784 = vmatprep.subr.mxu0 0.0
    %785 = vmatpush2.msra.mxu0 0.0
    %786 = vmatprep.subr.mxu0 0.0
    %787 = vmatpush2.msra.mxu0 0.0
    %788 = vmatprep.subr.mxu0 0.0
    %789 = vmatpush2.msra.mxu0 0.0
    %790 = vmatprep.subr.mxu0 0.0
    %791 = vmatpush2.msra.mxu0 0.0
    %792 = vmatprep.mubr.f32.mxu0 0.0
    %793 = vmatmul.mubr.f32.gmra.mxu0 %v726
    %v794 = vpop.f32.mrf.mxu0
    %v795 = vadd.f32 0.0, %v794
    %v796 = vpop.f32.mrf.mxu0
    %797 = vdwg.mxu0
    %v798 = vmax.f32 %v723, %v795
    %799 = vrot.lane.b32.xlu0 %v45, 88
    %v800 = vpop.permute.xlu0 %799
    %v801 = vsel %vm46, %v800, 0
    %803 = vmatprep.subr.mxu0 0.0
    %804 = vmatpush1.msra.mxu0 0.0
    %805 = vmatprep.subr.mxu0 0.0
    %806 = vmatpush1.msra.mxu0 0.0
    %807 = vmatprep.subr.mxu0 0.0
    %808 = vmatpush1.msra.mxu0 0.0
    %809 = vmatprep.subr.mxu0 0.0
    %810 = vmatpush1.msra.mxu0 0.0
    %811 = vmatprep.subr.mxu0 0.0
    %812 = vmatpush1.msra.mxu0 0.0
    %813 = vmatprep.subr.mxu0 0.0
    %814 = vmatpush1.msra.mxu0 0.0
    %815 = vmatprep.subr.mxu0 0.0
    %816 = vmatpush1.msra.mxu0 0.0
    %817 = vmatprep.subr.mxu0 0.0
    %818 = vmatpush1.msra.mxu0 0.0
    %819 = vmatprep.subr.mxu0 0.0
    %820 = vmatpush1.msra.mxu0 0.0
    %821 = vmatprep.subr.mxu0 0.0
    %822 = vmatpush1.msra.mxu0 0.0
    %823 = vmatprep.subr.mxu0 0.0
    %824 = vmatpush1.msra.mxu0 0.0
    %825 = vmatprep.subr.mxu0 0.0
    %826 = vmatpush1.msra.mxu0 0.0
    %827 = vmatprep.subr.mxu0 0.0
    %828 = vmatpush1.msra.mxu0 0.0
    %829 = vmatprep.subr.mxu0 0.0
    %830 = vmatpush1.msra.mxu0 %v52
    %831 = vmatprep.subr.mxu0 0.0
    %832 = vmatpush1.msra.mxu0 %v42
    %833 = vmatprep.subr.mxu0 0.0
    %834 = vmatpush1.msra.mxu0 %v41
    %835 = vmatprep.subr.mxu0 0.0
    %836 = vmatpush2.msra.mxu0 0.0
    %837 = vmatprep.subr.mxu0 0.0
    %838 = vmatpush2.msra.mxu0 0.0
    %839 = vmatprep.subr.mxu0 0.0
    %840 = vmatpush2.msra.mxu0 0.0
    %841 = vmatprep.subr.mxu0 0.0
    %842 = vmatpush2.msra.mxu0 0.0
    %843 = vmatprep.subr.mxu0 0.0
    %844 = vmatpush2.msra.mxu0 0.0
    %845 = vmatprep.subr.mxu0 0.0
    %846 = vmatpush2.msra.mxu0 0.0
    %847 = vmatprep.subr.mxu0 0.0
    %848 = vmatpush2.msra.mxu0 0.0
    %849 = vmatprep.subr.mxu0 0.0
    %850 = vmatpush2.msra.mxu0 0.0
    %851 = vmatprep.subr.mxu0 0.0
    %852 = vmatpush2.msra.mxu0 0.0
    %853 = vmatprep.subr.mxu0 0.0
    %854 = vmatpush2.msra.mxu0 0.0
    %855 = vmatprep.subr.mxu0 0.0
    %856 = vmatpush2.msra.mxu0 0.0
    %857 = vmatprep.subr.mxu0 0.0
    %858 = vmatpush2.msra.mxu0 0.0
    %859 = vmatprep.subr.mxu0 0.0
    %860 = vmatpush2.msra.mxu0 0.0
    %861 = vmatprep.subr.mxu0 0.0
    %862 = vmatpush2.msra.mxu0 0.0
    %863 = vmatprep.subr.mxu0 0.0
    %864 = vmatpush2.msra.mxu0 0.0
    %865 = vmatprep.subr.mxu0 0.0
    %866 = vmatpush2.msra.mxu0 0.0
    %867 = vmatprep.mubr.f32.mxu0 0.0
    %868 = vmatmul.mubr.f32.gmra.mxu0 %v801
    %v869 = vpop.f32.mrf.mxu0
    %v870 = vadd.f32 0.0, %v869
    %v871 = vpop.f32.mrf.mxu0
    %872 = vdwg.mxu0
    %v873 = vmax.f32 %v798, %v870
    %874 = vrot.lane.b32.xlu0 %v45, 84
    %v875 = vpop.permute.xlu0 %874
    %v876 = vsel %vm46, %v875, 0
    %878 = vmatprep.subr.mxu0 0.0
    %879 = vmatpush1.msra.mxu0 0.0
    %880 = vmatprep.subr.mxu0 0.0
    %881 = vmatpush1.msra.mxu0 0.0
    %882 = vmatprep.subr.mxu0 0.0
    %883 = vmatpush1.msra.mxu0 0.0
    %884 = vmatprep.subr.mxu0 0.0
    %885 = vmatpush1.msra.mxu0 0.0
    %886 = vmatprep.subr.mxu0 0.0
    %887 = vmatpush1.msra.mxu0 0.0
    %888 = vmatprep.subr.mxu0 0.0
    %889 = vmatpush1.msra.mxu0 0.0
    %890 = vmatprep.subr.mxu0 0.0
    %891 = vmatpush1.msra.mxu0 0.0
    %892 = vmatprep.subr.mxu0 0.0
    %893 = vmatpush1.msra.mxu0 0.0
    %894 = vmatprep.subr.mxu0 0.0
    %895 = vmatpush1.msra.mxu0 0.0
    %896 = vmatprep.subr.mxu0 0.0
    %897 = vmatpush1.msra.mxu0 0.0
    %898 = vmatprep.subr.mxu0 0.0
    %899 = vmatpush1.msra.mxu0 0.0
    %900 = vmatprep.subr.mxu0 0.0
    %901 = vmatpush1.msra.mxu0 0.0
    %902 = vmatprep.subr.mxu0 0.0
    %903 = vmatpush1.msra.mxu0 0.0
    %904 = vmatprep.subr.mxu0 0.0
    %905 = vmatpush1.msra.mxu0 %v52
    %906 = vmatprep.subr.mxu0 0.0
    %907 = vmatpush1.msra.mxu0 %v42
    %908 = vmatprep.subr.mxu0 0.0
    %909 = vmatpush1.msra.mxu0 %v41
    %910 = vmatprep.subr.mxu0 0.0
    %911 = vmatpush2.msra.mxu0 0.0
    %912 = vmatprep.subr.mxu0 0.0
    %913 = vmatpush2.msra.mxu0 0.0
    %914 = vmatprep.subr.mxu0 0.0
    %915 = vmatpush2.msra.mxu0 0.0
    %916 = vmatprep.subr.mxu0 0.0
    %917 = vmatpush2.msra.mxu0 0.0
    %918 = vmatprep.subr.mxu0 0.0
    %919 = vmatpush2.msra.mxu0 0.0
    %920 = vmatprep.subr.mxu0 0.0
    %921 = vmatpush2.msra.mxu0 0.0
    %922 = vmatprep.subr.mxu0 0.0
    %923 = vmatpush2.msra.mxu0 0.0
    %924 = vmatprep.subr.mxu0 0.0
    %925 = vmatpush2.msra.mxu0 0.0
    %926 = vmatprep.subr.mxu0 0.0
    %927 = vmatpush2.msra.mxu0 0.0
    %928 = vmatprep.subr.mxu0 0.0
    %929 = vmatpush2.msra.mxu0 0.0
    %930 = vmatprep.subr.mxu0 0.0
    %931 = vmatpush2.msra.mxu0 0.0
    %932 = vmatprep.subr.mxu0 0.0
    %933 = vmatpush2.msra.mxu0 0.0
    %934 = vmatprep.subr.mxu0 0.0
    %935 = vmatpush2.msra.mxu0 0.0
    %936 = vmatprep.subr.mxu0 0.0
    %937 = vmatpush2.msra.mxu0 0.0
    %938 = vmatprep.subr.mxu0 0.0
    %939 = vmatpush2.msra.mxu0 0.0
    %940 = vmatprep.subr.mxu0 0.0
    %941 = vmatpush2.msra.mxu0 0.0
    %942 = vmatprep.mubr.f32.mxu0 0.0
    %943 = vmatmul.mubr.f32.gmra.mxu0 %v876
    %v944 = vpop.f32.mrf.mxu0
    %v945 = vadd.f32 0.0, %v944
    %v946 = vpop.f32.mrf.mxu0
    %947 = vdwg.mxu0
    %v948 = vmax.f32 %v873, %v945
    %949 = vrot.lane.b32.xlu0 %v45, 80
    %v950 = vpop.permute.xlu0 %949
    %v951 = vsel %vm46, %v950, 0
    %953 = vmatprep.subr.mxu0 0.0
    %954 = vmatpush1.msra.mxu0 0.0
    %955 = vmatprep.subr.mxu0 0.0
    %956 = vmatpush1.msra.mxu0 0.0
    %957 = vmatprep.subr.mxu0 0.0
    %958 = vmatpush1.msra.mxu0 0.0
    %959 = vmatprep.subr.mxu0 0.0
    %960 = vmatpush1.msra.mxu0 0.0
    %961 = vmatprep.subr.mxu0 0.0
    %962 = vmatpush1.msra.mxu0 0.0
    %963 = vmatprep.subr.mxu0 0.0
    %964 = vmatpush1.msra.mxu0 0.0
    %965 = vmatprep.subr.mxu0 0.0
    %966 = vmatpush1.msra.mxu0 0.0
    %967 = vmatprep.subr.mxu0 0.0
    %968 = vmatpush1.msra.mxu0 0.0
    %969 = vmatprep.subr.mxu0 0.0
    %970 = vmatpush1.msra.mxu0 0.0
    %971 = vmatprep.subr.mxu0 0.0
    %972 = vmatpush1.msra.mxu0 0.0
    %973 = vmatprep.subr.mxu0 0.0
    %974 = vmatpush1.msra.mxu0 0.0
    %975 = vmatprep.subr.mxu0 0.0
    %976 = vmatpush1.msra.mxu0 0.0
    %977 = vmatprep.subr.mxu0 0.0
    %978 = vmatpush1.msra.mxu0 0.0
    %979 = vmatprep.subr.mxu0 0.0
    %980 = vmatpush1.msra.mxu0 %v52
    %981 = vmatprep.subr.mxu0 0.0
    %982 = vmatpush1.msra.mxu0 %v42
    %983 = vmatprep.subr.mxu0 0.0
    %984 = vmatpush1.msra.mxu0 %v41
    %985 = vmatprep.subr.mxu0 0.0
    %986 = vmatpush2.msra.mxu0 0.0
    %987 = vmatprep.subr.mxu0 0.0
    %988 = vmatpush2.msra.mxu0 0.0
    %989 = vmatprep.subr.mxu0 0.0
    %990 = vmatpush2.msra.mxu0 0.0
    %991 = vmatprep.subr.mxu0 0.0
    %992 = vmatpush2.msra.mxu0 0.0
    %993 = vmatprep.subr.mxu0 0.0
    %994 = vmatpush2.msra.mxu0 0.0
    %995 = vmatprep.subr.mxu0 0.0
    %996 = vmatpush2.msra.mxu0 0.0
    %997 = vmatprep.subr.mxu0 0.0
    %998 = vmatpush2.msra.mxu0 0.0
    %999 = vmatprep.subr.mxu0 0.0
    %1000 = vmatpush2.msra.mxu0 0.0
    %1001 = vmatprep.subr.mxu0 0.0
    %1002 = vmatpush2.msra.mxu0 0.0
    %1003 = vmatprep.subr.mxu0 0.0
    %1004 = vmatpush2.msra.mxu0 0.0
    %1005 = vmatprep.subr.mxu0 0.0
    %1006 = vmatpush2.msra.mxu0 0.0
    %1007 = vmatprep.subr.mxu0 0.0
    %1008 = vmatpush2.msra.mxu0 0.0
    %1009 = vmatprep.subr.mxu0 0.0
    %1010 = vmatpush2.msra.mxu0 0.0
    %1011 = vmatprep.subr.mxu0 0.0
    %1012 = vmatpush2.msra.mxu0 0.0
    %1013 = vmatprep.subr.mxu0 0.0
    %1014 = vmatpush2.msra.mxu0 0.0
    %1015 = vmatprep.subr.mxu0 0.0
    %1016 = vmatpush2.msra.mxu0 0.0
    %1017 = vmatprep.mubr.f32.mxu0 0.0
    %1018 = vmatmul.mubr.f32.gmra.mxu0 %v951
    %v1019 = vpop.f32.mrf.mxu0
    %v1020 = vadd.f32 0.0, %v1019
    %v1021 = vpop.f32.mrf.mxu0
    %1022 = vdwg.mxu0
    %v1023 = vmax.f32 %v948, %v1020
    %1024 = vrot.lane.b32.xlu0 %v45, 76
    %v1025 = vpop.permute.xlu0 %1024
    %v1026 = vsel %vm46, %v1025, 0
    %1028 = vmatprep.subr.mxu0 0.0
    %1029 = vmatpush1.msra.mxu0 0.0
    %1030 = vmatprep.subr.mxu0 0.0
    %1031 = vmatpush1.msra.mxu0 0.0
    %1032 = vmatprep.subr.mxu0 0.0
    %1033 = vmatpush1.msra.mxu0 0.0
    %1034 = vmatprep.subr.mxu0 0.0
    %1035 = vmatpush1.msra.mxu0 0.0
    %1036 = vmatprep.subr.mxu0 0.0
    %1037 = vmatpush1.msra.mxu0 0.0
    %1038 = vmatprep.subr.mxu0 0.0
    %1039 = vmatpush1.msra.mxu0 0.0
    %1040 = vmatprep.subr.mxu0 0.0
    %1041 = vmatpush1.msra.mxu0 0.0
    %1042 = vmatprep.subr.mxu0 0.0
    %1043 = vmatpush1.msra.mxu0 0.0
    %1044 = vmatprep.subr.mxu0 0.0
    %1045 = vmatpush1.msra.mxu0 0.0
    %1046 = vmatprep.subr.mxu0 0.0
    %1047 = vmatpush1.msra.mxu0 0.0
    %1048 = vmatprep.subr.mxu0 0.0
    %1049 = vmatpush1.msra.mxu0 0.0
    %1050 = vmatprep.subr.mxu0 0.0
    %1051 = vmatpush1.msra.mxu0 0.0
    %1052 = vmatprep.subr.mxu0 0.0
    %1053 = vmatpush1.msra.mxu0 0.0
    %1054 = vmatprep.subr.mxu0 0.0
    %1055 = vmatpush1.msra.mxu0 %v52
    %1056 = vmatprep.subr.mxu0 0.0
    %1057 = vmatpush1.msra.mxu0 %v42
    %1058 = vmatprep.subr.mxu0 0.0
    %1059 = vmatpush1.msra.mxu0 %v41
    %1060 = vmatprep.subr.mxu0 0.0
    %1061 = vmatpush2.msra.mxu0 0.0
    %1062 = vmatprep.subr.mxu0 0.0
    %1063 = vmatpush2.msra.mxu0 0.0
    %1064 = vmatprep.subr.mxu0 0.0
    %1065 = vmatpush2.msra.mxu0 0.0
    %1066 = vmatprep.subr.mxu0 0.0
    %1067 = vmatpush2.msra.mxu0 0.0
    %1068 = vmatprep.subr.mxu0 0.0
    %1069 = vmatpush2.msra.mxu0 0.0
    %1070 = vmatprep.subr.mxu0 0.0
    %1071 = vmatpush2.msra.mxu0 0.0
    %1072 = vmatprep.subr.mxu0 0.0
    %1073 = vmatpush2.msra.mxu0 0.0
    %1074 = vmatprep.subr.mxu0 0.0
    %1075 = vmatpush2.msra.mxu0 0.0
    %1076 = vmatprep.subr.mxu0 0.0
    %1077 = vmatpush2.msra.mxu0 0.0
    %1078 = vmatprep.subr.mxu0 0.0
    %1079 = vmatpush2.msra.mxu0 0.0
    %1080 = vmatprep.subr.mxu0 0.0
    %1081 = vmatpush2.msra.mxu0 0.0
    %1082 = vmatprep.subr.mxu0 0.0
    %1083 = vmatpush2.msra.mxu0 0.0
    %1084 = vmatprep.subr.mxu0 0.0
    %1085 = vmatpush2.msra.mxu0 0.0
    %1086 = vmatprep.subr.mxu0 0.0
    %1087 = vmatpush2.msra.mxu0 0.0
    %1088 = vmatprep.subr.mxu0 0.0
    %1089 = vmatpush2.msra.mxu0 0.0
    %1090 = vmatprep.subr.mxu0 0.0
    %1091 = vmatpush2.msra.mxu0 0.0
    %1092 = vmatprep.mubr.f32.mxu0 0.0
    %1093 = vmatmul.mubr.f32.gmra.mxu0 %v1026
    %v1094 = vpop.f32.mrf.mxu0
    %v1095 = vadd.f32 0.0, %v1094
    %v1096 = vpop.f32.mrf.mxu0
    %1097 = vdwg.mxu0
    %v1098 = vmax.f32 %v1023, %v1095
    %v1100 = vlaneseq
    %v1101 = vshrl.u32 %v1100, 7
    %v1102 = vsub.s32 0, %v1101
    %v1103 = vrot.slane %v44, %v1102
    %v1105 = vadd.f32 %v1098, %v1103
    %v1106 = vmax.f32 %v1105, 0.0
    %1107 = vst [vmem:[#allocation7] sm:$0xff] %v1106
    // Predicated region
    $region22: #{tpu_custom_call.1} parent=1 // pred_check
      _
    $region23: #{tpu_custom_call.1} parent=1 // pred_check_branch
      %1109 = sbr.rel (0) target = $region25
    $region24: #{tpu_custom_call.1} parent=1 // pred_region
      %s1111 = ssub.s32 128, 128
      %1112 = vsyncadd [#allocation4], %s1111
      %s1114 = sshll.u32 [#allocation7], 4
      %s1115 = int_to_ptr.vmem [resolvable:$true] %s1114
      %1117 = dma.vmem_to_hbm [thread:$0]  %s1115, 128, %s3, [#allocation4]
    $region25: #{tpu_custom_call.1} parent=1 // pred_fallthru
      _
    // Predicated region
    $region26: #{tpu_custom_call.1} parent=1 // pred_check
      _
    $region27: #{tpu_custom_call.1} parent=1 // pred_check_branch
      %1119 = sbr.rel (0) target = $region29
    $region28: #{tpu_custom_call.1} parent=1 // pred_region
      %1120 = dma.done [#allocation4], 128
    $region29: #{tpu_custom_call.1} parent=1 // pred_fallthru
      _
    %1121 = vsyncpa [#allocation3], 1
    %1122 = vsyncpa [#allocation6], 1
    %1123 = vsyncpa [#allocation4], 1

</llo_original>
